<compile_context>
chip_gen: v7x
topology: tpu7x:2x2x1
jax: 0.10.0
libtpu: 0.0.40
codegen_flags: <defaults>
</compile_context>

<pallas_src>
import functools

import jax
import jax.numpy as jnp
from jax.experimental import pallas as pl
from jax.experimental.pallas import tpu as pltpu


def _focal_kernel(logit_ref, target_ref, psum_ref, *, num_class, gamma,
                  smooth, alpha, balance_index, tile, hw, mask_tail):
    # logit_ref : (C, TILE)  float   -- classes on sublanes, positions on lanes
    # target_ref: (1, TILE)  int32   -- class index per position
    # psum_ref  : (1, 128)   float32 -- per-tile partial loss sum (lane 0)
    x = logit_ref[...].astype(jnp.float32)
    t = target_ref[...]

    # Softmax probability of the target class only (no full softmax / one-hot
    # / clip materialized): sublane max + sum over C.
    x_max = jnp.max(x, axis=0, keepdims=True)             # (1, TILE)
    e_x = jnp.exp(x - x_max)                              # (C, TILE)
    denom = jnp.sum(e_x, axis=0, keepdims=True)           # (1, TILE)

    # Gather the target logit before exp (one fewer (C,TILE) f32 temp);
    # out-of-range targets still yield e_t == 0 exactly as before.
    cls = jax.lax.broadcasted_iota(jnp.int32, x.shape, 0)
    x_t = jnp.max(jnp.where(cls == t, x, -jnp.inf), axis=0, keepdims=True)
    sm_t = jnp.exp(x_t - x_max) / denom                   # softmax[target]

    # Clipped one-hot (lo off-target, hi on-target) dotted with the softmax:
    #   pt = lo * (1 - sm_t) + hi * sm_t + smooth
    lo = smooth / (num_class - 1) if smooth else 0.0
    hi = 1.0 - smooth
    pt = lo + (hi - lo) * sm_t + smooth
    logpt = jnp.log(pt)

    one_minus_pt = 1.0 - pt
    if gamma == 2.0:                     # default: one VPU multiply, not EUP
        focal = one_minus_pt * one_minus_pt
    elif gamma == 1.0:
        focal = one_minus_pt
    elif gamma == 0.0:
        focal = jnp.ones_like(one_minus_pt)
    else:
        focal = jnp.power(one_minus_pt, gamma)

    if alpha is None:
        alpha_t = jnp.float32(1.0)
    else:
        alpha_t = jnp.where(t == balance_index,
                            jnp.float32(alpha), jnp.float32(1.0 - alpha))

    loss = -alpha_t * focal * logpt                       # (1, TILE)

    if mask_tail:
        # Ragged last tile: mask lanes past hw so exp/log garbage (possibly
        # NaN/inf) never reaches the partial sum.
        j = pl.program_id(1)
        pos = j * tile + jax.lax.broadcasted_iota(jnp.int32, loss.shape, 1)
        loss = jnp.where(pos < hw, loss, 0.0)

    # In-kernel partial reduce: scalar sum placed in lane 0 of a lane-dense
    # (1, 128) output block.  The cross-lane reduce rides the otherwise idle
    # XLU slot; the store is tiny vs. the old (N,1,HW) writeback + re-read.
    total = jnp.sum(loss)
    lane = jax.lax.broadcasted_iota(jnp.int32, (1, 128), 1)
    psum_ref[...] = jnp.where(lane == 0, total, 0.0).astype(psum_ref.dtype)


def focal_loss(logit, target, *, alpha=0.5, gamma=2.0, balance_index=0,
               smooth=1e-5, size_average=True,
               block_byte_target=4 * 1024 * 1024):
    """Pallas FocalLoss forward.

    logit:  (N, C, *spatial) float (NCHW in the reference module)
    target: (N, 1, *spatial) or (N, *spatial) integer class indices
    """
    if smooth is None:
        smooth = 0.0
    if smooth < 0 or smooth > 1.0:
        raise ValueError("smooth value should be in [0,1]")

    n, c = int(logit.shape[0]), int(logit.shape[1])
    hw = 1
    for d in logit.shape[2:]:
        hw *= int(d)
    if smooth > 0 and c < 2:
        raise ValueError("FocalLoss with smoothing requires num_class >= 2")

    if alpha is None:
        alpha_f = None
    elif isinstance(alpha, (int, float)):
        alpha_f = float(alpha)
    else:
        # TODO(synk): list/np.ndarray per-class alpha (normalized gather) not
        # implemented; only the float / None branches of the module are.
        raise TypeError("Not support alpha type (only float or None here)")

    # Free reshapes (no transpose / HBM relayout): class axis stays
    # contiguous-before-spatial exactly as in NCHW.
    logit_3d = logit.reshape(n, c, hw)
    target_3d = target.reshape(n, 1, hw)
    if target_3d.dtype != jnp.int32:
        # Only pay the extra HBM pass when the pipeline hands us non-int32.
        target_3d = target_3d.astype(jnp.int32)

    # ---- Spatial tile sized by bytes of the logit block (~4 MiB per step),
    # rounded to a multiple of 128 lanes.  Big enough to hit the HBM roofline
    # on all generations, small enough that double buffering + f32
    # intermediates stay well under v7x's 64 MiB/TC.
    itemsize = jnp.dtype(logit.dtype).itemsize
    tile = max(128, (int(block_byte_target) // (c * itemsize)) // 128 * 128)
    if hw <= 128 or (tile >= hw and hw % 128 != 0):
        tile = hw                       # one full-spatial block (== full dim)
    else:
        tile = min(tile, hw)
        tile = max(128, (tile // 128) * 128)
        # Keep >= ~4 grid steps so the DMA pipeline has overlap and both v7x
        # TensorCores get a share of the fully-parallel grid.
        while n * ((hw + tile - 1) // tile) < 4 and tile > 128:
            tile = max(128, ((tile // 2) // 128) * 128)

    num_tiles = pl.cdiv(hw, tile)
    grid = (n, num_tiles)
    mask_tail = (hw % tile) != 0

    kernel = functools.partial(
        _focal_kernel, num_class=c, gamma=float(gamma), smooth=float(smooth),
        alpha=alpha_f, balance_index=int(balance_index), tile=int(tile),
        hw=int(hw), mask_tail=bool(mask_tail))

    partials = pl.pallas_call(
        kernel,
        out_shape=jax.ShapeDtypeStruct((n, num_tiles, 1, 128), jnp.float32),
        grid_spec=pltpu.PrefetchScalarGridSpec(
            num_scalar_prefetch=0,
            grid=grid,
            in_specs=[
                pl.BlockSpec((pl.Squeezed(), c, tile),
                             lambda i, j: (i, 0, j)),
                pl.BlockSpec((pl.Squeezed(), 1, tile),
                             lambda i, j: (i, 0, j)),
            ],
            out_specs=pl.BlockSpec((pl.Squeezed(), pl.Squeezed(), 1, 128),
                                   lambda i, j: (i, j, 0, 0)),
        ),
        compiler_params=pltpu.CompilerParams(
            dimension_semantics=("parallel", "parallel"),
            vmem_limit_bytes=48 * 1024 * 1024),
    )(logit_3d, target_3d)

    total = jnp.sum(partials)
    if size_average:
        return total / jnp.float32(n * hw)
    return total


def _focal_loss_ref(logit, target, *, alpha=0.5, gamma=2.0, balance_index=0,
                    smooth=1e-5, size_average=True):
    """Pure-JAX reference mirroring the torch module."""
    n, c = logit.shape[0], logit.shape[1]
    x = jax.nn.softmax(logit.astype(jnp.float32), axis=1)
    x = jnp.moveaxis(x.reshape(n, c, -1), 1, 2).reshape(-1, c)
    t = target.reshape(-1).astype(jnp.int32)
    one_hot = jax.nn.one_hot(t, c, dtype=jnp.float32)
    one_hot = jnp.clip(one_hot, smooth / (c - 1), 1.0 - smooth)
    pt = jnp.sum(one_hot * x, axis=-1) + smooth
    logpt = jnp.log(pt)
    alpha_vec = jnp.full((c,), 1.0 - alpha, jnp.float32)
    alpha_vec = alpha_vec.at[balance_index].set(alpha)
    alpha_t = alpha_vec[t]
    loss = -alpha_t * jnp.power(1.0 - pt, gamma) * logpt
    return jnp.mean(loss) if size_average else jnp.sum(loss)


if __name__ == "__main__":
    key = jax.random.PRNGKey(0)
    k1, k2 = jax.random.split(key)

    N, C, H, W = 2, 4, 16, 16
    logit = jax.random.normal(k1, (N, C, H, W), dtype=jnp.float32)
    target = jax.random.randint(k2, (N, 1, H, W), 0, C, dtype=jnp.int32)

    loss = focal_loss(logit, target)
    loss = jax.block_until_ready(loss)

    ref = _focal_loss_ref(logit, target)
    assert jnp.allclose(loss, ref, rtol=1e-4, atol=1e-6), (loss, ref)

    print("KERNEL_OK")
</pallas_src>

<mosaic_0001>
module attributes {stable_mosaic.version = 11 : i64} {
  func.func @_focal_kernel(%arg0: i32, %arg1: i32, %arg2: memref<1x4x128xf32, #tpu.memory_space<vmem>>, %arg3: memref<1x1x128xi32, #tpu.memory_space<vmem>>, %arg4: memref<1x1x1x128xf32, #tpu.memory_space<vmem>>) attributes {dimension_semantics = [#tpu.dimension_semantics<parallel>, #tpu.dimension_semantics<parallel>], iteration_bounds = array<i64: 2, 2>, scalar_prefetch = 0 : i64, scratch_operands = 0 : i64, tpu.core_type = #tpu.core_type<tc>, window_params = [{transform_indices = @transform_0, window_bounds = array<i64: 1, 4, 128>}, {transform_indices = @transform_1, window_bounds = array<i64: 1, 1, 128>}, {transform_indices = @transform_2, window_bounds = array<i64: 1, 1, 1, 128>}]} {
    %c0 = arith.constant 0 : index
    %c0_0 = arith.constant 0 : index
    %c0_1 = arith.constant 0 : index
    %0 = vector.load %arg2[%c0, %c0_0, %c0_1] : memref<1x4x128xf32, #tpu.memory_space<vmem>>, vector<1x4x128xf32>
    %1 = vector.shape_cast %0 : vector<1x4x128xf32> to vector<4x128xf32>
    %c0_2 = arith.constant 0 : index
    %c0_3 = arith.constant 0 : index
    %c0_4 = arith.constant 0 : index
    %2 = vector.load %arg3[%c0_2, %c0_3, %c0_4] : memref<1x1x128xi32, #tpu.memory_space<vmem>>, vector<1x1x128xi32>
    %3 = vector.shape_cast %2 : vector<1x1x128xi32> to vector<1x128xi32>
    %cst = arith.constant dense<0xFF800000> : vector<128xf32>
    %4 = vector.multi_reduction <maximumf>, %1, %cst [0] : vector<4x128xf32> to vector<128xf32>
    %5 = vector.shape_cast %4 : vector<128xf32> to vector<1x128xf32>
    %6 = vector.broadcast %5 : vector<1x128xf32> to vector<4x128xf32>
    %7 = arith.subf %1, %6 : vector<4x128xf32>
    %8 = math.exp %7 : vector<4x128xf32>
    %cst_5 = arith.constant dense<0.000000e+00> : vector<128xf32>
    %9 = vector.multi_reduction <add>, %8, %cst_5 [0] : vector<4x128xf32> to vector<128xf32>
    %10 = vector.shape_cast %9 : vector<128xf32> to vector<1x128xf32>
    %11 = tpu.iota {dimensions = array<i32: 0>} : vector<4x128xi32>
    %12 = vector.broadcast %3 : vector<1x128xi32> to vector<4x128xi32>
    %13 = arith.cmpi eq, %11, %12 : vector<4x128xi32>
    %cst_6 = arith.constant 0xFF800000 : f32
    %14 = vector.broadcast %cst_6 : f32 to vector<4x128xf32>
    %15 = arith.select %13, %1, %14 : vector<4x128xi1>, vector<4x128xf32>
    %cst_7 = arith.constant dense<0xFF800000> : vector<128xf32>
    %16 = vector.multi_reduction <maximumf>, %15, %cst_7 [0] : vector<4x128xf32> to vector<128xf32>
    %17 = vector.shape_cast %16 : vector<128xf32> to vector<1x128xf32>
    %18 = arith.subf %17, %5 : vector<1x128xf32>
    %19 = math.exp %18 : vector<1x128xf32>
    %20 = arith.divf %19, %10 : vector<1x128xf32>
    %cst_8 = arith.constant 0.999986648 : f32
    %21 = vector.broadcast %cst_8 : f32 to vector<1x128xf32>
    %22 = arith.mulf %21, %20 : vector<1x128xf32>
    %cst_9 = arith.constant 3.33333332E-6 : f32
    %23 = vector.broadcast %cst_9 : f32 to vector<1x128xf32>
    %24 = arith.addf %23, %22 : vector<1x128xf32>
    %cst_10 = arith.constant 9.99999974E-6 : f32
    %25 = vector.broadcast %cst_10 : f32 to vector<1x128xf32>
    %26 = arith.addf %24, %25 : vector<1x128xf32>
    %27 = math.log %26 : vector<1x128xf32>
    %cst_11 = arith.constant 1.000000e+00 : f32
    %28 = vector.broadcast %cst_11 : f32 to vector<1x128xf32>
    %29 = arith.subf %28, %26 : vector<1x128xf32>
    %30 = arith.mulf %29, %29 : vector<1x128xf32>
    %c0_i32 = arith.constant 0 : i32
    %31 = vector.broadcast %c0_i32 : i32 to vector<1x128xi32>
    %32 = arith.cmpi eq, %3, %31 : vector<1x128xi32>
    %cst_12 = arith.constant 5.000000e-01 : f32
    %cst_13 = arith.constant 5.000000e-01 : f32
    %33 = vector.broadcast %cst_12 : f32 to vector<1x128xf32>
    %34 = vector.broadcast %cst_13 : f32 to vector<1x128xf32>
    %35 = arith.select %32, %33, %34 : vector<1x128xi1>, vector<1x128xf32>
    %cst_14 = arith.constant 0.000000e+00 : f32
    %36 = vector.broadcast %cst_14 : f32 to vector<1x128xf32>
    %37 = arith.subf %36, %35 : vector<1x128xf32>
    %38 = arith.mulf %37, %30 : vector<1x128xf32>
    %39 = arith.mulf %38, %27 : vector<1x128xf32>
    %40 = vector.shape_cast %39 : vector<1x128xf32> to vector<1x1x128xf32>
    %cst_15 = arith.constant dense<0.000000e+00> : vector<1xf32>
    %41 = vector.multi_reduction <add>, %40, %cst_15 [1, 2] : vector<1x1x128xf32> to vector<1xf32>
    %42 = vector.shape_cast %41 : vector<1xf32> to vector<1x1x1xf32>
    %43 = vector.extract %42[0, 0, 0] : f32 from vector<1x1x1xf32>
    %44 = tpu.iota {dimensions = array<i32: 1>} : vector<1x128xi32>
    %c0_i32_16 = arith.constant 0 : i32
    %45 = vector.broadcast %c0_i32_16 : i32 to vector<1x128xi32>
    %46 = arith.cmpi eq, %44, %45 : vector<1x128xi32>
    %cst_17 = arith.constant 0.000000e+00 : f32
    %47 = vector.broadcast %43 : f32 to vector<1x128xf32>
    %48 = vector.broadcast %cst_17 : f32 to vector<1x128xf32>
    %49 = arith.select %46, %47, %48 : vector<1x128xi1>, vector<1x128xf32>
    %c0_18 = arith.constant 0 : index
    %c0_19 = arith.constant 0 : index
    %c0_20 = arith.constant 0 : index
    %c0_21 = arith.constant 0 : index
    %50 = vector.load %arg4[%c0_18, %c0_19, %c0_20, %c0_21] : memref<1x1x1x128xf32, #tpu.memory_space<vmem>>, vector<1x1x1x128xf32>
    %51 = vector.shape_cast %50 : vector<1x1x1x128xf32> to vector<1x128xf32>
    %52 = vector.shape_cast %49 : vector<1x128xf32> to vector<1x1x1x128xf32>
    tpu.vector_store %arg4[%c0_18, %c0_19, %c0_20, %c0_21], %52 {strides = array<i32>} : memref<1x1x1x128xf32, #tpu.memory_space<vmem>>, vector<1x1x1x128xf32>,
    return
  }
  func.func @transform_0(%arg0: i32, %arg1: i32) -> (i32, i32, i32) {
    %c0_i32 = arith.constant 0 : i32
    %c0_i32_0 = arith.constant 0 : i32
    return %arg0, %c0_i32, %arg1 : i32, i32, i32
  }
  func.func @transform_1(%arg0: i32, %arg1: i32) -> (i32, i32, i32) {
    %c0_i32 = arith.constant 0 : i32
    %c0_i32_0 = arith.constant 0 : i32
    return %arg0, %c0_i32, %arg1 : i32, i32, i32
  }
  func.func @transform_2(%arg0: i32, %arg1: i32) -> (i32, i32, i32, i32) {
    %c0_i32 = arith.constant 0 : i32
    %c0_i32_0 = arith.constant 0 : i32
    %c0_i32_1 = arith.constant 0 : i32
    return %arg0, %arg1, %c0_i32, %c0_i32_0 : i32, i32, i32, i32
  }
}

</mosaic_0001>

<llo_original>
// kernel: tpu_custom_call.1
$region0: #{tpu_custom_call.1}
  #allocation0 [shape = 'u32[]', space=smem, size = 0x4, offset = 0x4, fixed_abs, tag = 'smem constant byte address 0x4 - core index']
  #allocation1 [shape = 'u32[144,128]{1,0:T(1,128)}', space=vmem, size = 0x12000, scoped, tag = 'internal scratch']
  %s0 = inlined_call_operand.hbm [shape: f32[2,4,256], index: 0, kind: input, shape index: {}]
  %s1 = inlined_call_operand.hbm [shape: s32[2,1,256], index: 1, kind: input, shape index: {}]
  %s2 = inlined_call_operand.hbm [shape: f32[2,2,1,128], index: 2, kind: output, shape index: {}]
  %s3 = sld [smem:[#allocation0]]
  $region49: #{tpu_custom_call.1} parent=0
    _
  %s5 = ssub.s32 1, %s3
  %s6 = scalar_select 0, %s5, %s3
  $region1: #{tpu_custom_call.1} parent=0
    #allocation2 [shape = 'u8[4096]{0}', space=vmem, size = 0x1000, scoped, tag = 'input window, operand 0']
    #allocation3 [shape = 's32[2]{0}', space=sflag, size = 0x8, scoped, tag = 'scoped memory for tpu_custom_call.1']
    #allocation4 [shape = 's32[2]{0}', space=sflag, size = 0x8, scoped, tag = 'scoped memory for tpu_custom_call.1']
    #allocation5 [shape = 'u8[1024]{0}', space=vmem, size = 0x400, scoped, tag = 'input window, operand 1']
    #allocation6 [shape = 's32[2]{0}', space=sflag, size = 0x8, scoped, tag = 'scoped memory for tpu_custom_call.1']
    #allocation7 [shape = 'u8[1024]{0}', space=vmem, size = 0x400, scoped, tag = 'output window, operand 0']
    %7 = vsyncpa [#allocation3], 0
    %s8 = scalar_lea.sflag [#allocation3], 1
    %9 = vsyncpa %s8, 0
    %10 = vsyncpa [#allocation6], 0
    %s11 = scalar_lea.sflag [#allocation6], 1
    %12 = vsyncpa %s11, 0
    %13 = vsyncpa [#allocation4], 0
    %s14 = scalar_lea.sflag [#allocation4], 1
    %15 = vsyncpa %s14, 0
    loop: start=0, step=1, limit=6
    $region2: #{tpu_custom_call.1} parent=1 // loop_pre_header
      _
    $region3: #{tpu_custom_call.1} parent=1 // loop_header
      %s17 = sphi 0, %s21
      %p18 = scmp.ge.s32.totalorder %s17, 6
      %s24 = sphi 0, %s36
      %s25 = sphi 0, %s32
      %s26 = sphi 0, %s24
      %s27 = sphi 0, %s25
      %s28 = sphi 0, %s26
      %s29 = sphi 0, %s27
      %s41 = sphi 0, %s43
      %s44 = sphi 0, %s41
      %s45 = sphi 0, %s44
      %s61 = sphi 0, %s45
      %s69 = sphi 0, %s71
      %s72 = sphi 0, %s69
      %s73 = sphi 0, %s72
      %s89 = sphi 0, %s73
      %s97 = sphi 0, %s99
      %s100 = sphi 0, %s97
      %s101 = sphi 0, %s100
      %s117 = sphi 0, %s101
    $region4: #{tpu_custom_call.1} parent=1 // loop_header_branch
      %20 = sbr.rel (%p18) target = $region8
    $region5: #{tpu_custom_call.1} parent=1 // loop_body
      %s22 = ssub.s32 %s17, 1
      %s23 = ssub.s32 %s17, 2
      %s30 = sadd.s32 1, %s25
      %p31 = scmp.ge.s32.totalorder %s30, 2
      %s32 = scalar_select %p31, 0, %s30
      %s33 = sadd.s32 1, %s24
      %s34 = scalar_select %p31, %s33, %s24
      %p35 = scmp.ge.s32.totalorder %s34, 2
      %s36 = scalar_select %p35, 0, %s34
      %s37 = ssub.s32 %s24, %s36
      %s38 = ssub.s32 %s25, %s32
      %s39 = sor.u32 %s37, %s38
      %p40 = scmp.eq.s32.totalorder %s39, 0
      %s42 = sadd.s32 %s41, 1
      %s43 = scalar_select %p40, %s41, %s42
      %p46 = pneg %p40
      %p47 = scmp.eq.s32.totalorder %s17, 3
      %p48 = por %p46, %p47
      %p49 = scmp.ne.s32.totalorder %s41, %s44
      %p50 = scmp.eq.s32.totalorder %s17, 0
      %p51 = por %p49, %p50
      %p52 = scmp.ne.s32.totalorder %s41, %s44
      %p53 = scmp.eq.s32.totalorder %s22, 3
      %p54 = por %p52, %p53
      %p55 = scmp.ne.s32.totalorder %s44, %s45
      %p56 = scmp.eq.s32.totalorder %s22, 0
      %p57 = por %p55, %p56
      %p58 = scmp.ne.s32.totalorder %s44, %s45
      %p59 = scmp.eq.s32.totalorder %s23, 3
      %p60 = por %p58, %p59
      %p62 = scmp.ne.s32.totalorder %s45, %s61
      %p63 = scmp.eq.s32.totalorder %s23, 0
      %p64 = por %p62, %p63
      %s65 = ssub.s32 %s24, %s36
      %s66 = ssub.s32 %s25, %s32
      %s67 = sor.u32 %s65, %s66
      %p68 = scmp.eq.s32.totalorder %s67, 0
      %s70 = sadd.s32 %s69, 1
      %s71 = scalar_select %p68, %s69, %s70
      %p74 = pneg %p68
      %p75 = scmp.eq.s32.totalorder %s17, 3
      %p76 = por %p74, %p75
      %p77 = scmp.ne.s32.totalorder %s69, %s72
      %p78 = scmp.eq.s32.totalorder %s17, 0
      %p79 = por %p77, %p78
      %p80 = scmp.ne.s32.totalorder %s69, %s72
      %p81 = scmp.eq.s32.totalorder %s22, 3
      %p82 = por %p80, %p81
      %p83 = scmp.ne.s32.totalorder %s72, %s73
      %p84 = scmp.eq.s32.totalorder %s22, 0
      %p85 = por %p83, %p84
      %p86 = scmp.ne.s32.totalorder %s72, %s73
      %p87 = scmp.eq.s32.totalorder %s23, 3
      %p88 = por %p86, %p87
      %p90 = scmp.ne.s32.totalorder %s73, %s89
      %p91 = scmp.eq.s32.totalorder %s23, 0
      %p92 = por %p90, %p91
      %s93 = ssub.s32 %s24, %s36
      %s94 = ssub.s32 %s25, %s32
      %s95 = sor.u32 %s93, %s94
      %p96 = scmp.eq.s32.totalorder %s95, 0
      %s98 = sadd.s32 %s97, 1
      %s99 = scalar_select %p96, %s97, %s98
      %p102 = pneg %p96
      %p103 = scmp.eq.s32.totalorder %s17, 3
      %p104 = por %p102, %p103
      %p105 = scmp.ne.s32.totalorder %s97, %s100
      %p106 = scmp.eq.s32.totalorder %s17, 0
      %p107 = por %p105, %p106
      %p108 = scmp.ne.s32.totalorder %s97, %s100
      %p109 = scmp.eq.s32.totalorder %s22, 3
      %p110 = por %p108, %p109
      %p111 = scmp.ne.s32.totalorder %s100, %s101
      %p112 = scmp.eq.s32.totalorder %s22, 0
      %p113 = por %p111, %p112
      %p114 = scmp.ne.s32.totalorder %s100, %s101
      %p115 = scmp.eq.s32.totalorder %s23, 3
      %p116 = por %p114, %p115
      %p118 = scmp.ne.s32.totalorder %s101, %s117
      %p119 = scmp.eq.s32.totalorder %s23, 0
      %p120 = por %p118, %p119
      %p121 = scmp.le.s32.totalorder 1, %s17
      %p122 = scmp.lt.s32.totalorder %s17, 5
      %p123 = pnand %p121, %p122
      %p124 = pneg %p123
      // Predicated region
      $region9: #{tpu_custom_call.1} parent=5 // pred_check
        _
      $region10: #{tpu_custom_call.1} parent=5 // pred_check_branch
        %126 = sbr.rel (%p123) target = $region12
      $region11: #{tpu_custom_call.1} parent=5 // pred_region
        %s127 = ssub.s32 %s17, 1
      $region12: #{tpu_custom_call.1} parent=5 // pred_fallthru
        _
      %p128 = scmp.lt.s32.totalorder %s17, 4
      // Predicated region
      $region13: #{tpu_custom_call.1} parent=5 // pred_check
        %p129 = pneg %p128
      $region14: #{tpu_custom_call.1} parent=5 // pred_check_branch
        %131 = sbr.rel (%p129) target = $region16
      $region15: #{tpu_custom_call.1} parent=5 // pred_region
        // Predicated region
        $region17: #{tpu_custom_call.1} parent=15 // pred_check
          %p132 = pneg %p51
        $region18: #{tpu_custom_call.1} parent=15 // pred_check_branch
          %134 = sbr.rel (%p132) target = $region20
        $region19: #{tpu_custom_call.1} parent=15 // pred_region
          %s135 = sand.u32 %s41, 1
          %s136 = scalar_lea.sflag [#allocation3], %s135
          %s137 = sand.u32 %s41, 1
          %s138 = smul.addr %s137, 4
          %s139 = scalar_lea.vmem [#allocation2], %s138
          %s141 = ssub.s32 64, 64
          %142 = vsyncadd %s136, %s141
          %s143 = smul.addr %s24, 2
          %s144 = sadd.s32 %s25, %s143
          %s145 = smul.addr %s144, 64
          %s146 = scalar_lea.hbm %s0, %s145
          %s148 = sshll.u32 %s139, 4
          %s149 = int_to_ptr.vmem [resolvable:$true] %s148
          %151 = dma.hbm_to_vmem [thread:$0]  %s146, 64, %s149, %s136
        $region20: #{tpu_custom_call.1} parent=15 // pred_fallthru
          _
        // Predicated region
        $region21: #{tpu_custom_call.1} parent=15 // pred_check
          %p152 = pneg %p79
        $region22: #{tpu_custom_call.1} parent=15 // pred_check_branch
          %154 = sbr.rel (%p152) target = $region24
        $region23: #{tpu_custom_call.1} parent=15 // pred_region
          %s155 = sand.u32 %s69, 1
          %s156 = scalar_lea.sflag [#allocation6], %s155
          %s157 = sand.u32 %s69, 1
          %s158 = scalar_lea.vmem [#allocation5], %s157
          %s160 = ssub.s32 16, 16
          %161 = vsyncadd %s156, %s160
          %s162 = smul.addr %s24, 2
          %s163 = sadd.s32 %s25, %s162
          %s164 = smul.addr %s163, 16
          %s165 = scalar_lea.hbm %s1, %s164
          %s167 = sshll.u32 %s158, 4
          %s168 = int_to_ptr.vmem [resolvable:$true] %s167
          %170 = dma.hbm_to_vmem [thread:$0]  %s165, 16, %s168, %s156
        $region24: #{tpu_custom_call.1} parent=15 // pred_fallthru
          _
      $region16: #{tpu_custom_call.1} parent=5 // pred_fallthru
        _
      %p171 = scmp.le.s32.totalorder 1, %s17
      %p172 = scmp.lt.s32.totalorder %s17, 5
      %p173 = pnand %p171, %p172
      %p174 = pneg %p173
      // Predicated region
      $region25: #{tpu_custom_call.1} parent=5 // pred_check
        _
      $region26: #{tpu_custom_call.1} parent=5 // pred_check_branch
        %176 = sbr.rel (%p173) target = $region28
      $region27: #{tpu_custom_call.1} parent=5 // pred_region
        %s177 = ssub.s32 %s17, 1
        %s178 = sand.u32 %s44, 1
        %s179 = scalar_lea.sflag [#allocation3], %s178
        %s180 = sand.u32 %s44, 1
        %s181 = smul.addr %s180, 4
        %s182 = scalar_lea.vmem [#allocation2], %s181
        // Predicated region
        $region29: #{tpu_custom_call.1} parent=27 // pred_check
          %p183 = pneg %p57
        $region30: #{tpu_custom_call.1} parent=27 // pred_check_branch
          %185 = sbr.rel (%p183) target = $region32
        $region31: #{tpu_custom_call.1} parent=27 // pred_region
          %186 = dma.done %s179, 64
        $region32: #{tpu_custom_call.1} parent=27 // pred_fallthru
          _
        %s187 = sand.u32 %s72, 1
        %s188 = scalar_lea.sflag [#allocation6], %s187
        %s189 = sand.u32 %s72, 1
        %s190 = scalar_lea.vmem [#allocation5], %s189
        // Predicated region
        $region33: #{tpu_custom_call.1} parent=27 // pred_check
          %p191 = pneg %p85
        $region34: #{tpu_custom_call.1} parent=27 // pred_check_branch
          %193 = sbr.rel (%p191) target = $region36
        $region35: #{tpu_custom_call.1} parent=27 // pred_region
          %194 = dma.done %s188, 16
        $region36: #{tpu_custom_call.1} parent=27 // pred_fallthru
          _
        %s195 = sand.u32 %s44, 1
        %s196 = scalar_lea.sflag [#allocation3], %s195
        %s197 = sand.u32 %s44, 1
        %s198 = smul.addr %s197, 4
        %s199 = scalar_lea.vmem [#allocation2], %s198
        %p200 = pneg %p57
        %p201 = pneg %p54
        %s202 = sand.u32 %s72, 1
        %s203 = scalar_lea.sflag [#allocation6], %s202
        %s204 = sand.u32 %s72, 1
        %s205 = scalar_lea.vmem [#allocation5], %s204
        %p206 = pneg %p85
        %p207 = pneg %p82
        %p208 = pneg %p113
        %p209 = pneg %p110
        %s210 = sand.u32 %s100, 1
        %s211 = scalar_lea.sflag [#allocation4], %s210
        %s212 = sand.u32 %s100, 1
        %s213 = scalar_lea.vmem [#allocation7], %s212
        %v214 = vld [vmem:[%s182] sm:$0xf]
        %v215 = vld [vmem:[%s190] sm:$0x1]
        %vm216 = vcmask 1043456
        %v217 = vsel %vm216, %v214, -inf
        %v218 = vrot.slane %v217, 4
        %v219 = vmax.f32 %v217, %v218
        %v220 = vrot.slane %v219, 2
        %v221 = vmax.f32 %v219, %v220
        %v222 = vrot.slane %v221, 1
        %v223 = vmax.f32 %v221, %v222
        %v224 = vsub.f32 %v214, %v223
        %v225 = vmul.f32 %v224, 1.442695
        %v226 = vpow.pop %v225
        %v227 = vsel %vm216, %v226, 0.0
        %v228 = vrot.slane %v227, 4
        %v229 = vadd.f32 %v227, %v228
        %v230 = vrot.slane %v229, 2
        %v231 = vadd.f32 %v229, %v230
        %v232 = vrot.slane %v231, 1
        %v233 = vadd.f32 %v231, %v232
        %v234 = vlaneseq
        %v235 = vshrl.u32 %v234, 7
        %v236 = vlaneseq
        %v237 = vshrl.u32 %v236, 7
        %v238 = vsub.s32 0, %v237
        %v239 = vrot.slane %v215, %v238
        %vm240 = vcmp.eq.s32.totalorder %v235, %v239
        %v241 = vsel %vm240, %v214, -inf
        %v242 = vsel %vm216, %v241, -inf
        %v243 = vrot.slane %v242, 4
        %v244 = vmax.f32 %v242, %v243
        %v245 = vrot.slane %v244, 2
        %v246 = vmax.f32 %v244, %v245
        %v247 = vrot.slane %v246, 1
        %v248 = vmax.f32 %v246, %v247
        %v249 = vsub.f32 %v248, %v223
        %v250 = vmul.f32 %v249, 1.442695
        %v251 = vpow.pop %v250
        %v252 = vrcp.pop %v233
        %v253 = vmul.f32 %v251, %v252
        %v254 = vmul.f32 %v253, 0.99998665
        %v255 = vadd.f32 %v254, 3.3333333e-06
        %v256 = vadd.f32 %v255, 1e-05
        %v257 = vlog2.pop %v256
        %v258 = vmul.f32 %v257, 0.6931472
        %v259 = vsub.f32 1.0, %v256
        %v260 = vmul.f32 %v259, %v259
        %v261 = vmul.f32 %v260, -0.5
        %v262 = vmul.f32 %v261, %v258
        %vm263 = vcmask 1040384
        %v264 = vsel %vm263, %v262, 0.0
        %265 = vadd.xlane.f32.xlu0 %v264
        %v266 = vpop.xlane.xlu0 %265
        %v267 = vrot.slane %v266, 4
        %v268 = vadd.f32 %v266, %v267
        %v269 = vrot.slane %v268, 2
        %v270 = vadd.f32 %v268, %v269
        %v271 = vrot.slane %v270, 1
        %v272 = vadd.f32 %v270, %v271
        %s273 = vtos %v272
        %v274 = vlaneseq
        %v275 = vand.u32 %v274, 127
        %vm276 = vcmp.eq.s32.totalorder %v275, 0
        %v277 = vstv %s273
        %v278 = vsel %vm276, %v277, 0.0
        %279 = vst [vmem:[%s213] sm:$0x1] %v278
        %s280 = sand.u32 %s100, 1
        %s281 = scalar_lea.sflag [#allocation4], %s280
        %s282 = sand.u32 %s100, 1
        %s283 = scalar_lea.vmem [#allocation7], %s282
        // Predicated region
        $region37: #{tpu_custom_call.1} parent=27 // pred_check
          %p284 = pneg %p110
        $region38: #{tpu_custom_call.1} parent=27 // pred_check_branch
          %286 = sbr.rel (%p284) target = $region40
        $region39: #{tpu_custom_call.1} parent=27 // pred_region
          %s288 = ssub.s32 16, 16
          %289 = vsyncadd %s281, %s288
          %s290 = smul.addr %s26, 2
          %s291 = sadd.s32 %s27, %s290
          %s292 = smul.addr %s291, 16
          %s293 = scalar_lea.hbm %s2, %s292
          %s295 = sshll.u32 %s283, 4
          %s296 = int_to_ptr.vmem [resolvable:$true] %s295
          %298 = dma.vmem_to_hbm [thread:$0]  %s296, 16, %s293, %s281
        $region40: #{tpu_custom_call.1} parent=27 // pred_fallthru
          _
      $region28: #{tpu_custom_call.1} parent=5 // pred_fallthru
        _
      %p299 = scmp.le.s32.totalorder 2, %s17
      // Predicated region
      $region41: #{tpu_custom_call.1} parent=5 // pred_check
        %p300 = pneg %p299
      $region42: #{tpu_custom_call.1} parent=5 // pred_check_branch
        %302 = sbr.rel (%p300) target = $region44
      $region43: #{tpu_custom_call.1} parent=5 // pred_region
        %s303 = ssub.s32 %s17, 2
        // Predicated region
        $region45: #{tpu_custom_call.1} parent=43 // pred_check
          %p304 = pneg %p116
        $region46: #{tpu_custom_call.1} parent=43 // pred_check_branch
          %306 = sbr.rel (%p304) target = $region48
        $region47: #{tpu_custom_call.1} parent=43 // pred_region
          %s307 = sand.u32 %s101, 1
          %s308 = scalar_lea.sflag [#allocation4], %s307
          %s309 = sand.u32 %s101, 1
          %s310 = scalar_lea.vmem [#allocation7], %s309
          %311 = dma.done %s308, 16
        $region48: #{tpu_custom_call.1} parent=43 // pred_fallthru
          _
      $region44: #{tpu_custom_call.1} parent=5 // pred_fallthru
        _
    $region6: #{tpu_custom_call.1} parent=1 // loop_footer
      %s21 = sadd.s32 1, %s17
    $region7: #{tpu_custom_call.1} parent=1 // loop_footer_branch
      %16 = sbr.rel target = $region3
    $region8: #{tpu_custom_call.1} parent=1 // loop_exit
      _
    %312 = vsyncpa [#allocation3], 1
    %s313 = scalar_lea.sflag [#allocation3], 1
    %314 = vsyncpa %s313, 1
    %315 = vsyncpa [#allocation6], 1
    %s316 = scalar_lea.sflag [#allocation6], 1
    %317 = vsyncpa %s316, 1
    %318 = vsyncpa [#allocation4], 1
    %s319 = scalar_lea.sflag [#allocation4], 1
    %320 = vsyncpa %s319, 1

</llo_original>
